<compile_context>
chip_gen: v7x
topology: tpu7x:2x2x1
jax: 0.10.0
libtpu: 0.0.40
codegen_flags: <defaults>
</compile_context>

<pallas_src>
import functools

import jax
import jax.numpy as jnp
from jax import lax
from jax.experimental import pallas as pl
from jax.experimental.pallas import tpu as pltpu


def _linear_block_kernel(a_ref, w_ref, b_ref, o_ref, acc_ref):
    """One (branch, M-tile, N-tile, K-tile) grid step.

    a_ref  : (tm, tk) bf16  activation tile (x for branch 0, y for branch 1)
    w_ref  : (tn, tk) bf16  weight tile, PyTorch (out, in) layout (no transpose)
    b_ref  : (1, tn)  f32   bias tile
    o_ref  : (tm, tn)       output tile
    acc_ref: (tm, tn) f32   VMEM accumulator, lives across the K axis
    """
    # All program_id reads happen at the top level of the kernel body (never
    # inside a pl.when body), so they lower cleanly on TPU and in interpret.
    branch = pl.program_id(0)
    k = pl.program_id(3)
    k_last = pl.num_programs(3) - 1
    apply_relu = branch == 0

    @pl.when(k == 0)
    def _init():
        acc_ref[...] = jnp.zeros_like(acc_ref)

    # x @ W.T: contract last dim of the activation tile with last dim of the
    # (out, in) weight tile.  bf16 operands, f32 MXU accumulation.
    acc_ref[...] += lax.dot_general(
        a_ref[...], w_ref[...],
        dimension_numbers=(((1,), (1,)), ((), ())),
        preferred_element_type=jnp.float32)

    @pl.when(k == k_last)
    def _finalize():
        # Bias added once, in the f32 epilogue (not per K tile).  ReLU only on
        # branch 0, as a branch-free select (VPU max + select, negligible).
        z = acc_ref[...] + b_ref[...]
        z = jnp.where(apply_relu, jnp.maximum(z, 0.0), z)
        o_ref[...] = z.astype(o_ref.dtype)


def _pick_tile(dim, cap):
    """Largest 128-aligned tile <= cap that divides dim (or the full dim)."""
    if dim <= cap:
        return dim
    t = cap
    while t >= 128:
        if dim % t == 0:
            return t
        t //= 2
    return dim  # fall back to a single block along this axis


def prepare_params(w1, b1, w2, b2):
    """One-time parameter packing (do at init time, not per forward call).

    Weights keep the PyTorch (out_features, in_features) layout — they are
    only stacked along a new branch axis and cast to bf16.  Biases stay f32
    (added in the f32 epilogue).
    """
    w = jnp.stack([w1, w2], axis=0).astype(jnp.bfloat16)              # (2, out, in)
    b = jnp.stack([b1, b2], axis=0).astype(jnp.float32)[:, None, :]   # (2, 1, out)
    return w, b


@functools.partial(jax.jit, static_argnames=("out_dtype",))
def linear_block_fwd(x, y, w, b, *, out_dtype=None):
    """Fused LinearBlock forward: (relu(x @ w1.T + b1), y @ w2.T + b2)."""
    B, in_f = x.shape
    out_f = w.shape[1]
    out_dtype = out_dtype or x.dtype

    # Stack the two branches; cast activations to bf16 at the kernel boundary.
    a = jnp.stack([x, y], axis=0).astype(jnp.bfloat16)                # (2, B, in)

    # Tile sizes: lane/N and K 128/256-aligned (v6e/v7x MXU is 2x256^2; 128 is
    # enough on v5e).  Double-buffered working set stays well under the scoped
    # VMEM default on every generation for these caps.
    tm = _pick_tile(B, 256)
    tn = _pick_tile(out_f, 256)
    tk = _pick_tile(in_f, 512)

    grid = (2, pl.cdiv(B, tm), pl.cdiv(out_f, tn), pl.cdiv(in_f, tk))

    out = pl.pallas_call(
        _linear_block_kernel,
        out_shape=jax.ShapeDtypeStruct((2, B, out_f), out_dtype),
        grid_spec=pltpu.PrefetchScalarGridSpec(
            num_scalar_prefetch=0,
            grid=grid,
            in_specs=[
                # activations (2, B, in); branch dim squeezed out of the view
                pl.BlockSpec((None, tm, tk), lambda p, i, j, k: (p, i, k)),
                # weights (2, out, in), PyTorch layout, no transpose
                pl.BlockSpec((None, tn, tk), lambda p, i, j, k: (p, j, k)),
                # biases (2, 1, out)
                pl.BlockSpec((None, 1, tn), lambda p, i, j, k: (p, 0, j)),
            ],
            out_specs=pl.BlockSpec((None, tm, tn), lambda p, i, j, k: (p, i, j)),
            scratch_shapes=[pltpu.VMEM((tm, tn), jnp.float32)],
        ),
        compiler_params=pltpu.CompilerParams(
            # branch/M/N shard across TensorCores (v7x megacore); K = reduction.
            dimension_semantics=("parallel", "parallel", "parallel", "arbitrary"),
        ),
    )(a, w, b)

    return out[0], out[1]


def linear_block(x, y, w1, b1, w2, b2):
    """Convenience wrapper taking raw PyTorch-layout parameters."""
    w, b = prepare_params(w1, b1, w2, b2)
    return linear_block_fwd(x, y, w, b)


if __name__ == "__main__":
    # 128/256-aligned shapes so tiles are lane-dense and the MXU sees full
    # passes; still tiny enough to run instantly.
    B = 128
    in_features = 256
    out_features = 256

    key = jax.random.PRNGKey(0)
    kx, ky, kw1, kb1, kw2, kb2 = jax.random.split(key, 6)

    x = jax.random.normal(kx, (B, in_features), dtype=jnp.float32)
    y = jax.random.normal(ky, (B, in_features), dtype=jnp.float32)

    # PyTorch-style uniform init with bound 1/sqrt(in_features).
    bound = 1.0 / (in_features ** 0.5)
    w1 = jax.random.uniform(kw1, (out_features, in_features), jnp.float32, -bound, bound)
    b1 = jax.random.uniform(kb1, (out_features,), jnp.float32, -bound, bound)
    w2 = jax.random.uniform(kw2, (out_features, in_features), jnp.float32, -bound, bound)
    b2 = jax.random.uniform(kb2, (out_features,), jnp.float32, -bound, bound)

    out_x, out_y = linear_block(x, y, w1, b1, w2, b2)
    jax.block_until_ready((out_x, out_y))

    # Reference with the same bf16 operand rounding the kernel uses
    # (f32 accumulation in both), so only summation-order noise remains.
    xb = x.astype(jnp.bfloat16).astype(jnp.float32)
    yb = y.astype(jnp.bfloat16).astype(jnp.float32)
    w1b = w1.astype(jnp.bfloat16).astype(jnp.float32)
    w2b = w2.astype(jnp.bfloat16).astype(jnp.float32)
    ref_x = jnp.maximum(xb @ w1b.T + b1, 0.0)
    ref_y = yb @ w2b.T + b2
    assert jnp.allclose(out_x, ref_x, atol=2e-3, rtol=2e-3), "x branch mismatch"
    assert jnp.allclose(out_y, ref_y, atol=2e-3, rtol=2e-3), "y branch mismatch"

    print("KERNEL_OK")
</pallas_src>

<mosaic_0001>
module attributes {stable_mosaic.version = 11 : i64} {
  func.func @_linear_block_kernel(%arg0: i32, %arg1: i32, %arg2: i32, %arg3: i32, %arg4: memref<1x128x256xbf16, #tpu.memory_space<vmem>>, %arg5: memref<1x256x256xbf16, #tpu.memory_space<vmem>>, %arg6: memref<1x1x256xf32, #tpu.memory_space<vmem>>, %arg7: memref<1x128x256xf32, #tpu.memory_space<vmem>>, %arg8: memref<128x256xf32, #tpu.memory_space<vmem>>) attributes {dimension_semantics = [#tpu.dimension_semantics<parallel>, #tpu.dimension_semantics<parallel>, #tpu.dimension_semantics<parallel>, #tpu.dimension_semantics<arbitrary>], iteration_bounds = array<i64: 2, 1, 1, 1>, scalar_prefetch = 0 : i64, scratch_operands = 1 : i64, tpu.core_type = #tpu.core_type<tc>, window_params = [{transform_indices = @transform_0, window_bounds = array<i64: 1, 128, 256>}, {transform_indices = @transform_1, window_bounds = array<i64: 1, 256, 256>}, {transform_indices = @transform_2, window_bounds = array<i64: 1, 1, 256>}, {transform_indices = @transform_3, window_bounds = array<i64: 1, 128, 256>}]} {
    %c0_i32 = arith.constant 0 : i32
    %0 = arith.cmpi eq, %arg0, %c0_i32 : i32
    %c0_i32_0 = arith.constant 0 : i32
    %1 = arith.cmpi eq, %arg3, %c0_i32_0 : i32
    %2 = arith.extui %1 : i1 to i32
    %c0_i32_1 = arith.constant 0 : i32
    %3 = arith.cmpi ne, %2, %c0_i32_1 : i32
    scf.if %3 {
      %cst_13 = arith.constant 0.000000e+00 : f32
      %15 = vector.broadcast %cst_13 : f32 to vector<128x256xf32>
      %c0_14 = arith.constant 0 : index
      %c0_15 = arith.constant 0 : index
      %16 = vector.load %arg8[%c0_14, %c0_15] : memref<128x256xf32, #tpu.memory_space<vmem>>, vector<128x256xf32>
      tpu.vector_store %arg8[%c0_14, %c0_15], %15 {strides = array<i32>} : memref<128x256xf32, #tpu.memory_space<vmem>>, vector<128x256xf32>,
    } else {
    }
    %c0 = arith.constant 0 : index
    %c0_2 = arith.constant 0 : index
    %4 = vector.load %arg8[%c0, %c0_2] : memref<128x256xf32, #tpu.memory_space<vmem>>, vector<128x256xf32>
    %c0_3 = arith.constant 0 : index
    %c0_4 = arith.constant 0 : index
    %c0_5 = arith.constant 0 : index
    %5 = vector.load %arg4[%c0_3, %c0_4, %c0_5] : memref<1x128x256xbf16, #tpu.memory_space<vmem>>, vector<1x128x256xbf16>
    %6 = vector.shape_cast %5 : vector<1x128x256xbf16> to vector<128x256xbf16>
    %c0_6 = arith.constant 0 : index
    %c0_7 = arith.constant 0 : index
    %c0_8 = arith.constant 0 : index
    %7 = vector.load %arg5[%c0_6, %c0_7, %c0_8] : memref<1x256x256xbf16, #tpu.memory_space<vmem>>, vector<1x256x256xbf16>
    %8 = vector.shape_cast %7 : vector<1x256x256xbf16> to vector<256x256xbf16>
    %cst = arith.constant dense<0.000000e+00> : vector<128x256xf32>
    %9 = tpu.matmul %6, %8, %cst {dimension_numbers = #tpu.dot_dimension_numbers<[1], [1], [0], [0], [0, 0, 1, 0], [], []>} : vector<128x256xbf16>, vector<256x256xbf16>, vector<128x256xf32> -> vector<128x256xf32>
    %10 = arith.addf %4, %9 : vector<128x256xf32>
    %c0_9 = arith.constant 0 : index
    %c0_10 = arith.constant 0 : index
    %11 = vector.load %arg8[%c0_9, %c0_10] : memref<128x256xf32, #tpu.memory_space<vmem>>, vector<128x256xf32>
    tpu.vector_store %arg8[%c0_9, %c0_10], %10 {strides = array<i32>} : memref<128x256xf32, #tpu.memory_space<vmem>>, vector<128x256xf32>,
    %c0_i32_11 = arith.constant 0 : i32
    %12 = arith.cmpi eq, %arg3, %c0_i32_11 : i32
    %13 = arith.extui %12 : i1 to i32
    %c0_i32_12 = arith.constant 0 : i32
    %14 = arith.cmpi ne, %13, %c0_i32_12 : i32
    scf.if %14 {
      %c0_13 = arith.constant 0 : index
      %c0_14 = arith.constant 0 : index
      %15 = vector.load %arg8[%c0_13, %c0_14] : memref<128x256xf32, #tpu.memory_space<vmem>>, vector<128x256xf32>
      %c0_15 = arith.constant 0 : index
      %c0_16 = arith.constant 0 : index
      %c0_17 = arith.constant 0 : index
      %16 = vector.load %arg6[%c0_15, %c0_16, %c0_17] : memref<1x1x256xf32, #tpu.memory_space<vmem>>, vector<1x1x256xf32>
      %17 = vector.shape_cast %16 : vector<1x1x256xf32> to vector<1x256xf32>
      %18 = vector.broadcast %17 : vector<1x256xf32> to vector<128x256xf32>
      %19 = arith.addf %15, %18 : vector<128x256xf32>
      %cst_18 = arith.constant 0.000000e+00 : f32
      %20 = vector.broadcast %cst_18 : f32 to vector<128x256xf32>
      %21 = arith.maximumf %19, %20 : vector<128x256xf32>
      %22 = arith.select %0, %21, %19 : vector<128x256xf32>
      %c0_19 = arith.constant 0 : index
      %c0_20 = arith.constant 0 : index
      %c0_21 = arith.constant 0 : index
      %23 = vector.load %arg7[%c0_19, %c0_20, %c0_21] : memref<1x128x256xf32, #tpu.memory_space<vmem>>, vector<1x128x256xf32>
      %24 = vector.shape_cast %23 : vector<1x128x256xf32> to vector<128x256xf32>
      %25 = vector.shape_cast %22 : vector<128x256xf32> to vector<1x128x256xf32>
      tpu.vector_store %arg7[%c0_19, %c0_20, %c0_21], %25 {strides = array<i32>} : memref<1x128x256xf32, #tpu.memory_space<vmem>>, vector<1x128x256xf32>,
    } else {
    }
    return
  }
  func.func @transform_0(%arg0: i32, %arg1: i32, %arg2: i32, %arg3: i32) -> (i32, i32, i32) {
    %c0_i32 = arith.constant 0 : i32
    return %arg0, %arg1, %arg3 : i32, i32, i32
  }
  func.func @transform_1(%arg0: i32, %arg1: i32, %arg2: i32, %arg3: i32) -> (i32, i32, i32) {
    %c0_i32 = arith.constant 0 : i32
    return %arg0, %arg2, %arg3 : i32, i32, i32
  }
  func.func @transform_2(%arg0: i32, %arg1: i32, %arg2: i32, %arg3: i32) -> (i32, i32, i32) {
    %c0_i32 = arith.constant 0 : i32
    %c0_i32_0 = arith.constant 0 : i32
    return %arg0, %c0_i32, %arg2 : i32, i32, i32
  }
  func.func @transform_3(%arg0: i32, %arg1: i32, %arg2: i32, %arg3: i32) -> (i32, i32, i32) {
    %c0_i32 = arith.constant 0 : i32
    return %arg0, %arg1, %arg2 : i32, i32, i32
  }
}

</mosaic_0001>

<llo_original>
// kernel: linear_block_fwd.1
$region0: #{linear_block_fwd.1}
  #allocation0 [shape = 'u32[]', space=smem, size = 0x4, offset = 0x4, fixed_abs, tag = 'smem constant byte address 0x4 - core index']
  #allocation1 [shape = 'u32[144,128]{1,0:T(1,128)}', space=vmem, size = 0x12000, scoped, tag = 'internal scratch']
  #allocation2 [shape = 'f32[128,256]{1,0:T(8,128)}', space=vmem, size = 0x20000, scoped, tag = 'scratch operand']
  %s0 = inlined_call_operand.vmem [shape: bf16[2,128,256], index: 0, kind: input, shape index: {}]
  %s1 = inlined_call_operand.vmem [shape: bf16[2,256,256], index: 1, kind: input, shape index: {}]
  %s2 = inlined_call_operand.vmem [shape: f32[2,1,256], index: 2, kind: input, shape index: {}]
  %s3 = inlined_call_operand.vmem [shape: f32[2,128,256], index: 3, kind: output, shape index: {}]
  %s4 = sld [smem:[#allocation0]]
  $region53: #{linear_block_fwd.1} parent=0
    _
  %s6 = ssub.s32 1, %s4
  %s7 = scalar_select 0, %s6, %s4
  loop: start=0, step=1, limit=4
  $region2: #{linear_block_fwd.1} parent=0 // loop_pre_header
    _
  $region3: #{linear_block_fwd.1} parent=0 // loop_header
    %s9 = sphi 0, %s13
    %p10 = scmp.ge.s32.totalorder %s9, 4
    %s16 = sphi 0, %s42
    %s17 = sphi 0, %s38
    %s18 = sphi 0, %s34
    %s19 = sphi 0, %s30
    %s20 = sphi 0, %s16
    %s21 = sphi 0, %s17
    %s22 = sphi 0, %s18
    %s23 = sphi 0, %s19
    %s24 = sphi 0, %s20
    %s25 = sphi 0, %s21
    %s26 = sphi 0, %s22
    %s27 = sphi 0, %s23
    %s49 = sphi 0, %s51
    %s52 = sphi 0, %s49
    %s53 = sphi 0, %s52
    %s69 = sphi 0, %s53
    %s79 = sphi 0, %s81
    %s82 = sphi 0, %s79
    %s83 = sphi 0, %s82
    %s99 = sphi 0, %s83
    %s107 = sphi 0, %s109
    %s110 = sphi 0, %s107
    %s111 = sphi 0, %s110
    %s127 = sphi 0, %s111
    %s137 = sphi 0, %s139
    %s140 = sphi 0, %s137
    %s141 = sphi 0, %s140
    %s157 = sphi 0, %s141
  $region4: #{linear_block_fwd.1} parent=0 // loop_header_branch
    %12 = sbr.rel (%p10) target = $region8
  $region5: #{linear_block_fwd.1} parent=0 // loop_body
    %s14 = ssub.s32 %s9, 1
    %s15 = ssub.s32 %s9, 2
    %s28 = sadd.s32 1, %s19
    %p29 = scmp.ge.s32.totalorder %s28, 1
    %s30 = scalar_select %p29, 0, %s28
    %s31 = sadd.s32 1, %s18
    %s32 = scalar_select %p29, %s31, %s18
    %p33 = scmp.ge.s32.totalorder %s32, 1
    %s34 = scalar_select %p33, 0, %s32
    %s35 = sadd.s32 1, %s17
    %s36 = scalar_select %p33, %s35, %s17
    %p37 = scmp.ge.s32.totalorder %s36, 1
    %s38 = scalar_select %p37, 0, %s36
    %s39 = sadd.s32 1, %s16
    %s40 = scalar_select %p37, %s39, %s16
    %p41 = scmp.ge.s32.totalorder %s40, 2
    %s42 = scalar_select %p41, 0, %s40
    %s43 = ssub.s32 %s16, %s42
    %s44 = ssub.s32 %s17, %s38
    %s45 = sor.u32 %s43, %s44
    %s46 = ssub.s32 %s19, %s30
    %s47 = sor.u32 %s45, %s46
    %p48 = scmp.eq.s32.totalorder %s47, 0
    %s50 = sadd.s32 %s49, 1
    %s51 = scalar_select %p48, %s49, %s50
    %p54 = pneg %p48
    %p55 = scmp.eq.s32.totalorder %s9, 1
    %p56 = por %p54, %p55
    %p57 = scmp.ne.s32.totalorder %s49, %s52
    %p58 = scmp.eq.s32.totalorder %s9, 0
    %p59 = por %p57, %p58
    %p60 = scmp.ne.s32.totalorder %s49, %s52
    %p61 = scmp.eq.s32.totalorder %s14, 1
    %p62 = por %p60, %p61
    %p63 = scmp.ne.s32.totalorder %s52, %s53
    %p64 = scmp.eq.s32.totalorder %s14, 0
    %p65 = por %p63, %p64
    %p66 = scmp.ne.s32.totalorder %s52, %s53
    %p67 = scmp.eq.s32.totalorder %s15, 1
    %p68 = por %p66, %p67
    %p70 = scmp.ne.s32.totalorder %s53, %s69
    %p71 = scmp.eq.s32.totalorder %s15, 0
    %p72 = por %p70, %p71
    %s73 = ssub.s32 %s16, %s42
    %s74 = ssub.s32 %s18, %s34
    %s75 = sor.u32 %s73, %s74
    %s76 = ssub.s32 %s19, %s30
    %s77 = sor.u32 %s75, %s76
    %p78 = scmp.eq.s32.totalorder %s77, 0
    %s80 = sadd.s32 %s79, 1
    %s81 = scalar_select %p78, %s79, %s80
    %p84 = pneg %p78
    %p85 = scmp.eq.s32.totalorder %s9, 1
    %p86 = por %p84, %p85
    %p87 = scmp.ne.s32.totalorder %s79, %s82
    %p88 = scmp.eq.s32.totalorder %s9, 0
    %p89 = por %p87, %p88
    %p90 = scmp.ne.s32.totalorder %s79, %s82
    %p91 = scmp.eq.s32.totalorder %s14, 1
    %p92 = por %p90, %p91
    %p93 = scmp.ne.s32.totalorder %s82, %s83
    %p94 = scmp.eq.s32.totalorder %s14, 0
    %p95 = por %p93, %p94
    %p96 = scmp.ne.s32.totalorder %s82, %s83
    %p97 = scmp.eq.s32.totalorder %s15, 1
    %p98 = por %p96, %p97
    %p100 = scmp.ne.s32.totalorder %s83, %s99
    %p101 = scmp.eq.s32.totalorder %s15, 0
    %p102 = por %p100, %p101
    %s103 = ssub.s32 %s16, %s42
    %s104 = ssub.s32 %s18, %s34
    %s105 = sor.u32 %s103, %s104
    %p106 = scmp.eq.s32.totalorder %s105, 0
    %s108 = sadd.s32 %s107, 1
    %s109 = scalar_select %p106, %s107, %s108
    %p112 = pneg %p106
    %p113 = scmp.eq.s32.totalorder %s9, 1
    %p114 = por %p112, %p113
    %p115 = scmp.ne.s32.totalorder %s107, %s110
    %p116 = scmp.eq.s32.totalorder %s9, 0
    %p117 = por %p115, %p116
    %p118 = scmp.ne.s32.totalorder %s107, %s110
    %p119 = scmp.eq.s32.totalorder %s14, 1
    %p120 = por %p118, %p119
    %p121 = scmp.ne.s32.totalorder %s110, %s111
    %p122 = scmp.eq.s32.totalorder %s14, 0
    %p123 = por %p121, %p122
    %p124 = scmp.ne.s32.totalorder %s110, %s111
    %p125 = scmp.eq.s32.totalorder %s15, 1
    %p126 = por %p124, %p125
    %p128 = scmp.ne.s32.totalorder %s111, %s127
    %p129 = scmp.eq.s32.totalorder %s15, 0
    %p130 = por %p128, %p129
    %s131 = ssub.s32 %s16, %s42
    %s132 = ssub.s32 %s17, %s38
    %s133 = sor.u32 %s131, %s132
    %s134 = ssub.s32 %s18, %s34
    %s135 = sor.u32 %s133, %s134
    %p136 = scmp.eq.s32.totalorder %s135, 0
    %s138 = sadd.s32 %s137, 1
    %s139 = scalar_select %p136, %s137, %s138
    %p142 = pneg %p136
    %p143 = scmp.eq.s32.totalorder %s9, 1
    %p144 = por %p142, %p143
    %p145 = scmp.ne.s32.totalorder %s137, %s140
    %p146 = scmp.eq.s32.totalorder %s9, 0
    %p147 = por %p145, %p146
    %p148 = scmp.ne.s32.totalorder %s137, %s140
    %p149 = scmp.eq.s32.totalorder %s14, 1
    %p150 = por %p148, %p149
    %p151 = scmp.ne.s32.totalorder %s140, %s141
    %p152 = scmp.eq.s32.totalorder %s14, 0
    %p153 = por %p151, %p152
    %p154 = scmp.ne.s32.totalorder %s140, %s141
    %p155 = scmp.eq.s32.totalorder %s15, 1
    %p156 = por %p154, %p155
    %p158 = scmp.ne.s32.totalorder %s141, %s157
    %p159 = scmp.eq.s32.totalorder %s15, 0
    %p160 = por %p158, %p159
    %p161 = scmp.le.s32.totalorder 1, %s9
    %p162 = scmp.lt.s32.totalorder %s9, 3
    %p163 = pnand %p161, %p162
    %p164 = pneg %p163
    // Predicated region
    $region9: #{linear_block_fwd.1} parent=5 // pred_check
      _
    $region10: #{linear_block_fwd.1} parent=5 // pred_check_branch
      %166 = sbr.rel (%p163) target = $region12
    $region11: #{linear_block_fwd.1} parent=5 // pred_region
      %s167 = ssub.s32 %s9, 1
    $region12: #{linear_block_fwd.1} parent=5 // pred_fallthru
      _
    %p168 = scmp.lt.s32.totalorder %s9, 2
    // Predicated region
    $region13: #{linear_block_fwd.1} parent=5 // pred_check
      %p169 = pneg %p168
    $region14: #{linear_block_fwd.1} parent=5 // pred_check_branch
      %171 = sbr.rel (%p169) target = $region16
    $region15: #{linear_block_fwd.1} parent=5 // pred_region
      // Predicated region
      $region17: #{linear_block_fwd.1} parent=15 // pred_check
        %p172 = pneg %p59
      $region18: #{linear_block_fwd.1} parent=15 // pred_check_branch
        %174 = sbr.rel (%p172) target = $region20
      $region19: #{linear_block_fwd.1} parent=15 // pred_region
        %s175 = smul.u32 16, %s17
        %s176 = smul.u32 2, %s19
        %p177 = scmp.lt.s32.totalorder %s16, 1
        %s178 = scalar_select %p177, %s16, 1
        %p179 = scmp.lt.s32.totalorder %s175, 15
        %s180 = scalar_select %p179, %s175, 15
        %p181 = scmp.lt.s32.totalorder %s176, 1
        %s182 = scalar_select %p181, %s176, 1
        %s183 = smul.addr %s180, 2
        %s184 = sadd.s32 %s182, %s183
        %s185 = smul.addr %s178, 32
        %s186 = sadd.s32 %s184, %s185
        %s187 = smul.addr %s186, 4
        %s188 = scalar_lea.vmem %s0, %s187
        %s189 = smul.u32 16, %s17
        %s190 = smul.u32 2, %s19
      $region20: #{linear_block_fwd.1} parent=15 // pred_fallthru
        _
      // Predicated region
      $region21: #{linear_block_fwd.1} parent=15 // pred_check
        %p191 = pneg %p89
      $region22: #{linear_block_fwd.1} parent=15 // pred_check_branch
        %193 = sbr.rel (%p191) target = $region24
      $region23: #{linear_block_fwd.1} parent=15 // pred_region
        %s194 = smul.u32 32, %s18
        %s195 = smul.u32 2, %s19
        %p196 = scmp.lt.s32.totalorder %s16, 1
        %s197 = scalar_select %p196, %s16, 1
        %p198 = scmp.lt.s32.totalorder %s194, 31
        %s199 = scalar_select %p198, %s194, 31
        %p200 = scmp.lt.s32.totalorder %s195, 1
        %s201 = scalar_select %p200, %s195, 1
        %s202 = smul.addr %s199, 2
        %s203 = sadd.s32 %s201, %s202
        %s204 = smul.addr %s197, 64
        %s205 = sadd.s32 %s203, %s204
        %s206 = smul.addr %s205, 4
        %s207 = scalar_lea.vmem %s1, %s206
        %s208 = smul.u32 32, %s18
        %s209 = smul.u32 2, %s19
      $region24: #{linear_block_fwd.1} parent=15 // pred_fallthru
        _
      // Predicated region
      $region25: #{linear_block_fwd.1} parent=15 // pred_check
        %p210 = pneg %p117
      $region26: #{linear_block_fwd.1} parent=15 // pred_check_branch
        %212 = sbr.rel (%p210) target = $region28
      $region27: #{linear_block_fwd.1} parent=15 // pred_region
        %s213 = smul.u32 2, %s18
        %p214 = scmp.lt.s32.totalorder %s16, 1
        %s215 = scalar_select %p214, %s16, 1
        %p216 = scmp.lt.s32.totalorder %s213, 1
        %s217 = scalar_select %p216, %s213, 1
        %s218 = smul.addr %s215, 2
        %s219 = sadd.s32 %s217, %s218
        %s220 = scalar_lea.vmem %s2, %s219
        %s221 = smul.u32 2, %s18
      $region28: #{linear_block_fwd.1} parent=15 // pred_fallthru
        _
    $region16: #{linear_block_fwd.1} parent=5 // pred_fallthru
      _
    %p222 = scmp.le.s32.totalorder 1, %s9
    %p223 = scmp.lt.s32.totalorder %s9, 3
    %p224 = pnand %p222, %p223
    %p225 = pneg %p224
    // Predicated region
    $region29: #{linear_block_fwd.1} parent=5 // pred_check
      _
    $region30: #{linear_block_fwd.1} parent=5 // pred_check_branch
      %227 = sbr.rel (%p224) target = $region32
    $region31: #{linear_block_fwd.1} parent=5 // pred_region
      %s228 = ssub.s32 %s9, 1
      %s229 = smul.u32 16, %s21
      %s230 = smul.u32 2, %s23
      %p231 = scmp.lt.s32.totalorder %s20, 1
      %s232 = scalar_select %p231, %s20, 1
      %p233 = scmp.lt.s32.totalorder %s229, 15
      %s234 = scalar_select %p233, %s229, 15
      %p235 = scmp.lt.s32.totalorder %s230, 1
      %s236 = scalar_select %p235, %s230, 1
      %s237 = smul.addr %s234, 2
      %s238 = sadd.s32 %s236, %s237
      %s239 = smul.addr %s232, 32
      %s240 = sadd.s32 %s238, %s239
      %s241 = smul.addr %s240, 4
      %s242 = scalar_lea.vmem %s0, %s241
      %p243 = pneg %p65
      %p244 = pneg %p62
      %s245 = smul.u32 32, %s22
      %s246 = smul.u32 2, %s23
      %p247 = scmp.lt.s32.totalorder %s20, 1
      %s248 = scalar_select %p247, %s20, 1
      %p249 = scmp.lt.s32.totalorder %s245, 31
      %s250 = scalar_select %p249, %s245, 31
      %p251 = scmp.lt.s32.totalorder %s246, 1
      %s252 = scalar_select %p251, %s246, 1
      %s253 = smul.addr %s250, 2
      %s254 = sadd.s32 %s252, %s253
      %s255 = smul.addr %s248, 64
      %s256 = sadd.s32 %s254, %s255
      %s257 = smul.addr %s256, 4
      %s258 = scalar_lea.vmem %s1, %s257
      %p259 = pneg %p95
      %p260 = pneg %p92
      %s261 = smul.u32 2, %s22
      %p262 = scmp.lt.s32.totalorder %s20, 1
      %s263 = scalar_select %p262, %s20, 1
      %p264 = scmp.lt.s32.totalorder %s261, 1
      %s265 = scalar_select %p264, %s261, 1
      %s266 = smul.addr %s263, 2
      %s267 = sadd.s32 %s265, %s266
      %s268 = scalar_lea.vmem %s2, %s267
      %p269 = pneg %p123
      %p270 = pneg %p120
      %p271 = pneg %p153
      %p272 = pneg %p150
      %s273 = smul.u32 16, %s21
      %s274 = smul.u32 2, %s22
      %p275 = scmp.lt.s32.totalorder %s20, 1
      %s276 = scalar_select %p275, %s20, 1
      %p277 = scmp.lt.s32.totalorder %s273, 15
      %s278 = scalar_select %p277, %s273, 15
      %p279 = scmp.lt.s32.totalorder %s274, 1
      %s280 = scalar_select %p279, %s274, 1
      %s281 = smul.addr %s278, 2
      %s282 = sadd.s32 %s280, %s281
      %s283 = smul.addr %s276, 32
      %s284 = sadd.s32 %s282, %s283
      %s285 = smul.addr %s284, 8
      %s286 = scalar_lea.vmem %s3, %s285
      %s287 = smul.u32 16, %s21
      %s288 = smul.u32 2, %s23
      %p289 = scmp.lt.s32.totalorder %s20, 1
      %s290 = scalar_select %p289, %s20, 1
      %p291 = scmp.lt.s32.totalorder %s287, 15
      %s292 = scalar_select %p291, %s287, 15
      %p293 = scmp.lt.s32.totalorder %s288, 1
      %s294 = scalar_select %p293, %s288, 1
      %s295 = smul.addr %s292, 2
      %s296 = sadd.s32 %s294, %s295
      %s297 = smul.addr %s290, 32
      %s298 = sadd.s32 %s296, %s297
      %s299 = smul.addr %s298, 4
      %s300 = scalar_lea.vmem %s0, %s299
      %s301 = smul.u32 16, %s21
      %s302 = smul.u32 2, %s23
      %s303 = smul.u32 32, %s22
      %s304 = smul.u32 2, %s23
      %p305 = scmp.lt.s32.totalorder %s20, 1
      %s306 = scalar_select %p305, %s20, 1
      %p307 = scmp.lt.s32.totalorder %s303, 31
      %s308 = scalar_select %p307, %s303, 31
      %p309 = scmp.lt.s32.totalorder %s304, 1
      %s310 = scalar_select %p309, %s304, 1
      %s311 = smul.addr %s308, 2
      %s312 = sadd.s32 %s310, %s311
      %s313 = smul.addr %s306, 64
      %s314 = sadd.s32 %s312, %s313
      %s315 = smul.addr %s314, 4
      %s316 = scalar_lea.vmem %s1, %s315
      %s317 = smul.u32 32, %s22
      %s318 = smul.u32 2, %s23
      %s319 = smul.u32 2, %s22
      %p320 = scmp.lt.s32.totalorder %s20, 1
      %s321 = scalar_select %p320, %s20, 1
      %p322 = scmp.lt.s32.totalorder %s319, 1
      %s323 = scalar_select %p322, %s319, 1
      %s324 = smul.addr %s321, 2
      %s325 = sadd.s32 %s323, %s324
      %s326 = scalar_lea.vmem %s2, %s325
      %s327 = smul.u32 2, %s22
      %s328 = smul.u32 16, %s21
      %s329 = smul.u32 2, %s22
      %p330 = scmp.lt.s32.totalorder %s20, 1
      %s331 = scalar_select %p330, %s20, 1
      %p332 = scmp.lt.s32.totalorder %s328, 15
      %s333 = scalar_select %p332, %s328, 15
      %p334 = scmp.lt.s32.totalorder %s329, 1
      %s335 = scalar_select %p334, %s329, 1
      %s336 = smul.addr %s333, 2
      %s337 = sadd.s32 %s335, %s336
      %s338 = smul.addr %s331, 32
      %s339 = sadd.s32 %s337, %s338
      %s340 = smul.addr %s339, 8
      %s341 = scalar_lea.vmem %s3, %s340
      %s342 = smul.u32 16, %s21
      %s343 = smul.u32 2, %s22
      %p344 = scmp.eq.s32.totalorder %s20, 0
      %p345 = scmp.eq.s32.totalorder %s23, 0
      // Predicated region
      $region33: #{linear_block_fwd.1} parent=31 // pred_check
        %p346 = pneg %p345
      $region34: #{linear_block_fwd.1} parent=31 // pred_check_branch
        %348 = sbr.rel (%p346) target = $region36
      $region35: #{linear_block_fwd.1} parent=31 // pred_region
        %349 = vst [vmem:[#allocation2] sm:$0xff] 0.0
        %350 = vst [vmem:[#allocation2 + $0x8] sm:$0xff] 0.0
        %351 = vst [vmem:[#allocation2 + $0x10] sm:$0xff] 0.0
        %352 = vst [vmem:[#allocation2 + $0x18] sm:$0xff] 0.0
        %353 = vst [vmem:[#allocation2 + $0x20] sm:$0xff] 0.0
        %354 = vst [vmem:[#allocation2 + $0x28] sm:$0xff] 0.0
        %355 = vst [vmem:[#allocation2 + $0x30] sm:$0xff] 0.0
        %356 = vst [vmem:[#allocation2 + $0x38] sm:$0xff] 0.0
        %357 = vst [vmem:[#allocation2 + $0x40] sm:$0xff] 0.0
        %358 = vst [vmem:[#allocation2 + $0x48] sm:$0xff] 0.0
        %359 = vst [vmem:[#allocation2 + $0x50] sm:$0xff] 0.0
        %360 = vst [vmem:[#allocation2 + $0x58] sm:$0xff] 0.0
        %361 = vst [vmem:[#allocation2 + $0x60] sm:$0xff] 0.0
        %362 = vst [vmem:[#allocation2 + $0x68] sm:$0xff] 0.0
        %363 = vst [vmem:[#allocation2 + $0x70] sm:$0xff] 0.0
        %364 = vst [vmem:[#allocation2 + $0x78] sm:$0xff] 0.0
        %365 = vst [vmem:[#allocation2 + $0x80] sm:$0xff] 0.0
        %366 = vst [vmem:[#allocation2 + $0x88] sm:$0xff] 0.0
        %367 = vst [vmem:[#allocation2 + $0x90] sm:$0xff] 0.0
        %368 = vst [vmem:[#allocation2 + $0x98] sm:$0xff] 0.0
        %369 = vst [vmem:[#allocation2 + $0xa0] sm:$0xff] 0.0
        %370 = vst [vmem:[#allocation2 + $0xa8] sm:$0xff] 0.0
        %371 = vst [vmem:[#allocation2 + $0xb0] sm:$0xff] 0.0
        %372 = vst [vmem:[#allocation2 + $0xb8] sm:$0xff] 0.0
        %373 = vst [vmem:[#allocation2 + $0xc0] sm:$0xff] 0.0
        %374 = vst [vmem:[#allocation2 + $0xc8] sm:$0xff] 0.0
        %375 = vst [vmem:[#allocation2 + $0xd0] sm:$0xff] 0.0
        %376 = vst [vmem:[#allocation2 + $0xd8] sm:$0xff] 0.0
        %377 = vst [vmem:[#allocation2 + $0xe0] sm:$0xff] 0.0
        %378 = vst [vmem:[#allocation2 + $0xe8] sm:$0xff] 0.0
        %379 = vst [vmem:[#allocation2 + $0xf0] sm:$0xff] 0.0
        %380 = vst [vmem:[#allocation2 + $0xf8] sm:$0xff] 0.0
      $region36: #{linear_block_fwd.1} parent=31 // pred_fallthru
        _
      %v381 = vld [vmem:[#allocation2] sm:$0xff]
      %v382 = vld [vmem:[#allocation2 + $0x8] sm:$0xff]
      %v383 = vld [vmem:[#allocation2 + $0x10] sm:$0xff]
      %v384 = vld [vmem:[#allocation2 + $0x18] sm:$0xff]
      %v385 = vld [vmem:[#allocation2 + $0x20] sm:$0xff]
      %v386 = vld [vmem:[#allocation2 + $0x28] sm:$0xff]
      %v387 = vld [vmem:[#allocation2 + $0x30] sm:$0xff]
      %v388 = vld [vmem:[#allocation2 + $0x38] sm:$0xff]
      %v389 = vld [vmem:[#allocation2 + $0x40] sm:$0xff]
      %v390 = vld [vmem:[#allocation2 + $0x48] sm:$0xff]
      %v391 = vld [vmem:[#allocation2 + $0x50] sm:$0xff]
      %v392 = vld [vmem:[#allocation2 + $0x58] sm:$0xff]
      %v393 = vld [vmem:[#allocation2 + $0x60] sm:$0xff]
      %v394 = vld [vmem:[#allocation2 + $0x68] sm:$0xff]
      %v395 = vld [vmem:[#allocation2 + $0x70] sm:$0xff]
      %v396 = vld [vmem:[#allocation2 + $0x78] sm:$0xff]
      %v397 = vld [vmem:[#allocation2 + $0x80] sm:$0xff]
      %v398 = vld [vmem:[#allocation2 + $0x88] sm:$0xff]
      %v399 = vld [vmem:[#allocation2 + $0x90] sm:$0xff]
      %v400 = vld [vmem:[#allocation2 + $0x98] sm:$0xff]
      %v401 = vld [vmem:[#allocation2 + $0xa0] sm:$0xff]
      %v402 = vld [vmem:[#allocation2 + $0xa8] sm:$0xff]
      %v403 = vld [vmem:[#allocation2 + $0xb0] sm:$0xff]
      %v404 = vld [vmem:[#allocation2 + $0xb8] sm:$0xff]
      %v405 = vld [vmem:[#allocation2 + $0xc0] sm:$0xff]
      %v406 = vld [vmem:[#allocation2 + $0xc8] sm:$0xff]
      %v407 = vld [vmem:[#allocation2 + $0xd0] sm:$0xff]
      %v408 = vld [vmem:[#allocation2 + $0xd8] sm:$0xff]
      %v409 = vld [vmem:[#allocation2 + $0xe0] sm:$0xff]
      %v410 = vld [vmem:[#allocation2 + $0xe8] sm:$0xff]
      %v411 = vld [vmem:[#allocation2 + $0xf0] sm:$0xff]
      %v412 = vld [vmem:[#allocation2 + $0xf8] sm:$0xff]
      %v413 = vld [vmem:[%s300] sm:$0xff]
      %v414 = vld [vmem:[%s300 + $0x8] sm:$0xff]
      %v415 = vld [vmem:[%s300 + $0x10] sm:$0xff]
      %v416 = vld [vmem:[%s300 + $0x18] sm:$0xff]
      %v417 = vld [vmem:[%s300 + $0x20] sm:$0xff]
      %v418 = vld [vmem:[%s300 + $0x28] sm:$0xff]
      %v419 = vld [vmem:[%s300 + $0x30] sm:$0xff]
      %v420 = vld [vmem:[%s300 + $0x38] sm:$0xff]
      %v421 = vld [vmem:[%s300 + $0x40] sm:$0xff]
      %v422 = vld [vmem:[%s300 + $0x48] sm:$0xff]
      %v423 = vld [vmem:[%s300 + $0x50] sm:$0xff]
      %v424 = vld [vmem:[%s300 + $0x58] sm:$0xff]
      %v425 = vld [vmem:[%s300 + $0x60] sm:$0xff]
      %v426 = vld [vmem:[%s300 + $0x68] sm:$0xff]
      %v427 = vld [vmem:[%s300 + $0x70] sm:$0xff]
      %v428 = vld [vmem:[%s300 + $0x78] sm:$0xff]
      %v429 = vld [vmem:[%s316] sm:$0xff]
      %v430 = vld [vmem:[%s316 + $0x8] sm:$0xff]
      %v431 = vld [vmem:[%s316 + $0x10] sm:$0xff]
      %v432 = vld [vmem:[%s316 + $0x18] sm:$0xff]
      %v433 = vld [vmem:[%s316 + $0x20] sm:$0xff]
      %v434 = vld [vmem:[%s316 + $0x28] sm:$0xff]
      %v435 = vld [vmem:[%s316 + $0x30] sm:$0xff]
      %v436 = vld [vmem:[%s316 + $0x38] sm:$0xff]
      %v437 = vld [vmem:[%s316 + $0x40] sm:$0xff]
      %v438 = vld [vmem:[%s316 + $0x48] sm:$0xff]
      %v439 = vld [vmem:[%s316 + $0x50] sm:$0xff]
      %v440 = vld [vmem:[%s316 + $0x58] sm:$0xff]
      %v441 = vld [vmem:[%s316 + $0x60] sm:$0xff]
      %v442 = vld [vmem:[%s316 + $0x68] sm:$0xff]
      %v443 = vld [vmem:[%s316 + $0x70] sm:$0xff]
      %v444 = vld [vmem:[%s316 + $0x78] sm:$0xff]
      %v445 = vld [vmem:[%s316 + $0x80] sm:$0xff]
      %v446 = vld [vmem:[%s316 + $0x88] sm:$0xff]
      %v447 = vld [vmem:[%s316 + $0x90] sm:$0xff]
      %v448 = vld [vmem:[%s316 + $0x98] sm:$0xff]
      %v449 = vld [vmem:[%s316 + $0xa0] sm:$0xff]
      %v450 = vld [vmem:[%s316 + $0xa8] sm:$0xff]
      %v451 = vld [vmem:[%s316 + $0xb0] sm:$0xff]
      %v452 = vld [vmem:[%s316 + $0xb8] sm:$0xff]
      %v453 = vld [vmem:[%s316 + $0xc0] sm:$0xff]
      %v454 = vld [vmem:[%s316 + $0xc8] sm:$0xff]
      %v455 = vld [vmem:[%s316 + $0xd0] sm:$0xff]
      %v456 = vld [vmem:[%s316 + $0xd8] sm:$0xff]
      %v457 = vld [vmem:[%s316 + $0xe0] sm:$0xff]
      %v458 = vld [vmem:[%s316 + $0xe8] sm:$0xff]
      %v459 = vld [vmem:[%s316 + $0xf0] sm:$0xff]
      %v460 = vld [vmem:[%s316 + $0xf8] sm:$0xff]
      %v477 = vunpack.c.l.b16 %v413
      %v478 = vunpack.c.h.b16 %v413
      %v479 = vunpack.c.l.b16 %v414
      %v480 = vunpack.c.h.b16 %v414
      %v481 = vunpack.c.l.b16 %v415
      %v482 = vunpack.c.h.b16 %v415
      %v483 = vunpack.c.l.b16 %v416
      %v484 = vunpack.c.h.b16 %v416
      %v485 = vunpack.c.l.b16 %v417
      %v486 = vunpack.c.h.b16 %v417
      %v487 = vunpack.c.l.b16 %v418
      %v488 = vunpack.c.h.b16 %v418
      %v489 = vunpack.c.l.b16 %v419
      %v490 = vunpack.c.h.b16 %v419
      %v491 = vunpack.c.l.b16 %v420
      %v492 = vunpack.c.h.b16 %v420
      %v493 = vunpack.c.l.b16 %v421
      %v494 = vunpack.c.h.b16 %v421
      %v495 = vunpack.c.l.b16 %v422
      %v496 = vunpack.c.h.b16 %v422
      %v497 = vunpack.c.l.b16 %v423
      %v498 = vunpack.c.h.b16 %v423
      %v499 = vunpack.c.l.b16 %v424
      %v500 = vunpack.c.h.b16 %v424
      %v501 = vunpack.c.l.b16 %v425
      %v502 = vunpack.c.h.b16 %v425
      %v503 = vunpack.c.l.b16 %v426
      %v504 = vunpack.c.h.b16 %v426
      %v505 = vunpack.c.l.b16 %v427
      %v506 = vunpack.c.h.b16 %v427
      %v507 = vunpack.c.l.b16 %v428
      %v508 = vunpack.c.h.b16 %v428
      %v509 = vpack.c.b16 %v479, %v477
      %v510 = vpack.c.b16 %v480, %v478
      %v511 = vpack.c.b16 %v483, %v481
      %v512 = vpack.c.b16 %v484, %v482
      %v513 = vpack.c.b16 %v487, %v485
      %v514 = vpack.c.b16 %v488, %v486
      %v515 = vpack.c.b16 %v491, %v489
      %v516 = vpack.c.b16 %v492, %v490
      %v517 = vpack.c.b16 %v495, %v493
      %v518 = vpack.c.b16 %v496, %v494
      %v519 = vpack.c.b16 %v499, %v497
      %v520 = vpack.c.b16 %v500, %v498
      %v521 = vpack.c.b16 %v503, %v501
      %v522 = vpack.c.b16 %v504, %v502
      %v523 = vpack.c.b16 %v507, %v505
      %v524 = vpack.c.b16 %v508, %v506
      %v573 = vunpack.c.l.b16 %v429
      %v574 = vunpack.c.h.b16 %v429
      %v575 = vunpack.c.l.b16 %v430
      %v576 = vunpack.c.h.b16 %v430
      %v577 = vunpack.c.l.b16 %v431
      %v578 = vunpack.c.h.b16 %v431
      %v579 = vunpack.c.l.b16 %v432
      %v580 = vunpack.c.h.b16 %v432
      %v581 = vunpack.c.l.b16 %v433
      %v582 = vunpack.c.h.b16 %v433
      %v583 = vunpack.c.l.b16 %v434
      %v584 = vunpack.c.h.b16 %v434
      %v585 = vunpack.c.l.b16 %v435
      %v586 = vunpack.c.h.b16 %v435
      %v587 = vunpack.c.l.b16 %v436
      %v588 = vunpack.c.h.b16 %v436
      %v589 = vunpack.c.l.b16 %v437
      %v590 = vunpack.c.h.b16 %v437
      %v591 = vunpack.c.l.b16 %v438
      %v592 = vunpack.c.h.b16 %v438
      %v593 = vunpack.c.l.b16 %v439
      %v594 = vunpack.c.h.b16 %v439
      %v595 = vunpack.c.l.b16 %v440
      %v596 = vunpack.c.h.b16 %v440
      %v597 = vunpack.c.l.b16 %v441
      %v598 = vunpack.c.h.b16 %v441
      %v599 = vunpack.c.l.b16 %v442
      %v600 = vunpack.c.h.b16 %v442
      %v601 = vunpack.c.l.b16 %v443
      %v602 = vunpack.c.h.b16 %v443
      %v603 = vunpack.c.l.b16 %v444
      %v604 = vunpack.c.h.b16 %v444
      %v605 = vunpack.c.l.b16 %v445
      %v606 = vunpack.c.h.b16 %v445
      %v607 = vunpack.c.l.b16 %v446
      %v608 = vunpack.c.h.b16 %v446
      %v609 = vunpack.c.l.b16 %v447
      %v610 = vunpack.c.h.b16 %v447
      %v611 = vunpack.c.l.b16 %v448
      %v612 = vunpack.c.h.b16 %v448
      %v613 = vunpack.c.l.b16 %v449
      %v614 = vunpack.c.h.b16 %v449
      %v615 = vunpack.c.l.b16 %v450
      %v616 = vunpack.c.h.b16 %v450
      %v617 = vunpack.c.l.b16 %v451
      %v618 = vunpack.c.h.b16 %v451
      %v619 = vunpack.c.l.b16 %v452
      %v620 = vunpack.c.h.b16 %v452
      %v621 = vunpack.c.l.b16 %v453
      %v622 = vunpack.c.h.b16 %v453
      %v623 = vunpack.c.l.b16 %v454
      %v624 = vunpack.c.h.b16 %v454
      %v625 = vunpack.c.l.b16 %v455
      %v626 = vunpack.c.h.b16 %v455
      %v627 = vunpack.c.l.b16 %v456
      %v628 = vunpack.c.h.b16 %v456
      %v629 = vunpack.c.l.b16 %v457
      %v630 = vunpack.c.h.b16 %v457
      %v631 = vunpack.c.l.b16 %v458
      %v632 = vunpack.c.h.b16 %v458
      %v633 = vunpack.c.l.b16 %v459
      %v634 = vunpack.c.h.b16 %v459
      %v635 = vunpack.c.l.b16 %v460
      %v636 = vunpack.c.h.b16 %v460
      %v637 = vpack.c.b16 %v575, %v573
      %v638 = vpack.c.b16 %v576, %v574
      %v639 = vpack.c.b16 %v579, %v577
      %v640 = vpack.c.b16 %v580, %v578
      %v641 = vpack.c.b16 %v583, %v581
      %v642 = vpack.c.b16 %v584, %v582
      %v643 = vpack.c.b16 %v587, %v585
      %v644 = vpack.c.b16 %v588, %v586
      %v645 = vpack.c.b16 %v591, %v589
      %v646 = vpack.c.b16 %v592, %v590
      %v647 = vpack.c.b16 %v595, %v593
      %v648 = vpack.c.b16 %v596, %v594
      %v649 = vpack.c.b16 %v599, %v597
      %v650 = vpack.c.b16 %v600, %v598
      %v651 = vpack.c.b16 %v603, %v601
      %v652 = vpack.c.b16 %v604, %v602
      %v653 = vpack.c.b16 %v607, %v605
      %v654 = vpack.c.b16 %v608, %v606
      %v655 = vpack.c.b16 %v611, %v609
      %v656 = vpack.c.b16 %v612, %v610
      %v657 = vpack.c.b16 %v615, %v613
      %v658 = vpack.c.b16 %v616, %v614
      %v659 = vpack.c.b16 %v619, %v617
      %v660 = vpack.c.b16 %v620, %v618
      %v661 = vpack.c.b16 %v623, %v621
      %v662 = vpack.c.b16 %v624, %v622
      %v663 = vpack.c.b16 %v627, %v625
      %v664 = vpack.c.b16 %v628, %v626
      %v665 = vpack.c.b16 %v631, %v629
      %v666 = vpack.c.b16 %v632, %v630
      %v667 = vpack.c.b16 %v635, %v633
      %v668 = vpack.c.b16 %v636, %v634
      %701 = vmatprep.subr.bf16.mxu0 %v638
      %702 = vmatpush1.bf16.xpose.msra.mxu0 %v637
      %703 = vmatprep.subr.bf16.mxu0 %v640
      %704 = vmatpush1.bf16.xpose.msra.mxu0 %v639
      %705 = vmatprep.subr.bf16.mxu0 %v642
      %706 = vmatpush1.bf16.xpose.msra.mxu0 %v641
      %707 = vmatprep.subr.bf16.mxu0 %v644
      %708 = vmatpush1.bf16.xpose.msra.mxu0 %v643
      %709 = vmatprep.subr.bf16.mxu0 %v646
      %710 = vmatpush1.bf16.xpose.msra.mxu0 %v645
      %711 = vmatprep.subr.bf16.mxu0 %v648
      %712 = vmatpush1.bf16.xpose.msra.mxu0 %v647
      %713 = vmatprep.subr.bf16.mxu0 %v650
      %714 = vmatpush1.bf16.xpose.msra.mxu0 %v649
      %715 = vmatprep.subr.bf16.mxu0 %v652
      %716 = vmatpush1.bf16.xpose.msra.mxu0 %v651
      %717 = vmatprep.subr.bf16.mxu0 %v654
      %718 = vmatpush1.bf16.xpose.msra.mxu0 %v653
      %719 = vmatprep.subr.bf16.mxu0 %v656
      %720 = vmatpush1.bf16.xpose.msra.mxu0 %v655
      %721 = vmatprep.subr.bf16.mxu0 %v658
      %722 = vmatpush1.bf16.xpose.msra.mxu0 %v657
      %723 = vmatprep.subr.bf16.mxu0 %v660
      %724 = vmatpush1.bf16.xpose.msra.mxu0 %v659
      %725 = vmatprep.subr.bf16.mxu0 %v662
      %726 = vmatpush1.bf16.xpose.msra.mxu0 %v661
      %727 = vmatprep.subr.bf16.mxu0 %v664
      %728 = vmatpush1.bf16.xpose.msra.mxu0 %v663
      %729 = vmatprep.subr.bf16.mxu0 %v666
      %730 = vmatpush1.bf16.xpose.msra.mxu0 %v665
      %731 = vmatprep.subr.bf16.mxu0 %v668
      %732 = vmatpush1.bf16.xpose.msra.mxu0 %v667
      %733 = vmatprep.mubr.bf16.mxu0 %v510
      %734 = vmatmul.mubr.bf16.gmra.mrb[0].mxu0 %v509
      %v735 = vpop.f32.mrb[0].mxu0
      %v736 = vadd.f32 0.0, %v735
      %v737 = vpop.f32.mrb[0].mxu0
      %v738 = vadd.f32 0.0, %v737
      %v739 = vpop.f32.mrb[0].mxu0
      %v740 = vadd.f32 0.0, %v739
      %v741 = vpop.f32.mrb[0].mxu0
      %v742 = vadd.f32 0.0, %v741
      %743 = vmatprep.mubr.bf16.mxu0 %v512
      %744 = vmatmul.mubr.bf16.gmra.mrb[0].mxu0 %v511
      %v745 = vpop.f32.mrb[0].mxu0
      %v746 = vadd.f32 0.0, %v745
      %v747 = vpop.f32.mrb[0].mxu0
      %v748 = vadd.f32 0.0, %v747
      %v749 = vpop.f32.mrb[0].mxu0
      %v750 = vadd.f32 0.0, %v749
      %v751 = vpop.f32.mrb[0].mxu0
      %v752 = vadd.f32 0.0, %v751
      %753 = vmatprep.mubr.bf16.mxu0 %v514
      %754 = vmatmul.mubr.bf16.gmra.mrb[0].mxu0 %v513
      %v755 = vpop.f32.mrb[0].mxu0
      %v756 = vadd.f32 0.0, %v755
      %v757 = vpop.f32.mrb[0].mxu0
      %v758 = vadd.f32 0.0, %v757
      %v759 = vpop.f32.mrb[0].mxu0
      %v760 = vadd.f32 0.0, %v759
      %v761 = vpop.f32.mrb[0].mxu0
      %v762 = vadd.f32 0.0, %v761
      %763 = vmatprep.mubr.bf16.mxu0 %v516
      %764 = vmatmul.mubr.bf16.gmra.mrb[0].mxu0 %v515
      %v765 = vpop.f32.mrb[0].mxu0
      %v766 = vadd.f32 0.0, %v765
      %v767 = vpop.f32.mrb[0].mxu0
      %v768 = vadd.f32 0.0, %v767
      %v769 = vpop.f32.mrb[0].mxu0
      %v770 = vadd.f32 0.0, %v769
      %v771 = vpop.f32.mrb[0].mxu0
      %v772 = vadd.f32 0.0, %v771
      %773 = vmatprep.mubr.bf16.mxu0 %v518
      %774 = vmatmul.mubr.bf16.gmra.mrb[0].mxu0 %v517
      %v775 = vpop.f32.mrb[0].mxu0
      %v776 = vadd.f32 0.0, %v775
      %v777 = vpop.f32.mrb[0].mxu0
      %v778 = vadd.f32 0.0, %v777
      %v779 = vpop.f32.mrb[0].mxu0
      %v780 = vadd.f32 0.0, %v779
      %v781 = vpop.f32.mrb[0].mxu0
      %v782 = vadd.f32 0.0, %v781
      %783 = vmatprep.mubr.bf16.mxu0 %v520
      %784 = vmatmul.mubr.bf16.gmra.mrb[0].mxu0 %v519
      %v785 = vpop.f32.mrb[0].mxu0
      %v786 = vadd.f32 0.0, %v785
      %v787 = vpop.f32.mrb[0].mxu0
      %v788 = vadd.f32 0.0, %v787
      %v789 = vpop.f32.mrb[0].mxu0
      %v790 = vadd.f32 0.0, %v789
      %v791 = vpop.f32.mrb[0].mxu0
      %v792 = vadd.f32 0.0, %v791
      %793 = vmatprep.mubr.bf16.mxu0 %v522
      %794 = vmatmul.mubr.bf16.gmra.mrb[0].mxu0 %v521
      %v795 = vpop.f32.mrb[0].mxu0
      %v796 = vadd.f32 0.0, %v795
      %v797 = vpop.f32.mrb[0].mxu0
      %v798 = vadd.f32 0.0, %v797
      %v799 = vpop.f32.mrb[0].mxu0
      %v800 = vadd.f32 0.0, %v799
      %v801 = vpop.f32.mrb[0].mxu0
      %v802 = vadd.f32 0.0, %v801
      %803 = vmatprep.mubr.bf16.mxu0 %v524
      %804 = vmatmul.mubr.bf16.gmra.mrb[0].mxu0 %v523
      %v805 = vpop.f32.mrb[0].mxu0
      %v806 = vadd.f32 0.0, %v805
      %v807 = vpop.f32.mrb[0].mxu0
      %v808 = vadd.f32 0.0, %v807
      %v809 = vpop.f32.mrb[0].mxu0
      %v810 = vadd.f32 0.0, %v809
      %v811 = vpop.f32.mrb[0].mxu0
      %v812 = vadd.f32 0.0, %v811
      %813 = vdwg.mxu0
      %v814 = vadd.f32 %v381, %v736
      %v815 = vadd.f32 %v382, %v738
      %v816 = vadd.f32 %v383, %v740
      %v817 = vadd.f32 %v384, %v742
      %v818 = vadd.f32 %v385, %v746
      %v819 = vadd.f32 %v386, %v748
      %v820 = vadd.f32 %v387, %v750
      %v821 = vadd.f32 %v388, %v752
      %v822 = vadd.f32 %v389, %v756
      %v823 = vadd.f32 %v390, %v758
      %v824 = vadd.f32 %v391, %v760
      %v825 = vadd.f32 %v392, %v762
      %v826 = vadd.f32 %v393, %v766
      %v827 = vadd.f32 %v394, %v768
      %v828 = vadd.f32 %v395, %v770
      %v829 = vadd.f32 %v396, %v772
      %v830 = vadd.f32 %v397, %v776
      %v831 = vadd.f32 %v398, %v778
      %v832 = vadd.f32 %v399, %v780
      %v833 = vadd.f32 %v400, %v782
      %v834 = vadd.f32 %v401, %v786
      %v835 = vadd.f32 %v402, %v788
      %v836 = vadd.f32 %v403, %v790
      %v837 = vadd.f32 %v404, %v792
      %v838 = vadd.f32 %v405, %v796
      %v839 = vadd.f32 %v406, %v798
      %v840 = vadd.f32 %v407, %v800
      %v841 = vadd.f32 %v408, %v802
      %v842 = vadd.f32 %v409, %v806
      %v843 = vadd.f32 %v410, %v808
      %v844 = vadd.f32 %v411, %v810
      %v845 = vadd.f32 %v412, %v812
      %846 = vst [vmem:[#allocation2] sm:$0xff] %v814
      %847 = vst [vmem:[#allocation2 + $0x8] sm:$0xff] %v815
      %848 = vst [vmem:[#allocation2 + $0x10] sm:$0xff] %v816
      %849 = vst [vmem:[#allocation2 + $0x18] sm:$0xff] %v817
      %850 = vst [vmem:[#allocation2 + $0x20] sm:$0xff] %v818
      %851 = vst [vmem:[#allocation2 + $0x28] sm:$0xff] %v819
      %852 = vst [vmem:[#allocation2 + $0x30] sm:$0xff] %v820
      %853 = vst [vmem:[#allocation2 + $0x38] sm:$0xff] %v821
      %854 = vst [vmem:[#allocation2 + $0x40] sm:$0xff] %v822
      %855 = vst [vmem:[#allocation2 + $0x48] sm:$0xff] %v823
      %856 = vst [vmem:[#allocation2 + $0x50] sm:$0xff] %v824
      %857 = vst [vmem:[#allocation2 + $0x58] sm:$0xff] %v825
      %858 = vst [vmem:[#allocation2 + $0x60] sm:$0xff] %v826
      %859 = vst [vmem:[#allocation2 + $0x68] sm:$0xff] %v827
      %860 = vst [vmem:[#allocation2 + $0x70] sm:$0xff] %v828
      %861 = vst [vmem:[#allocation2 + $0x78] sm:$0xff] %v829
      %862 = vst [vmem:[#allocation2 + $0x80] sm:$0xff] %v830
      %863 = vst [vmem:[#allocation2 + $0x88] sm:$0xff] %v831
      %864 = vst [vmem:[#allocation2 + $0x90] sm:$0xff] %v832
      %865 = vst [vmem:[#allocation2 + $0x98] sm:$0xff] %v833
      %866 = vst [vmem:[#allocation2 + $0xa0] sm:$0xff] %v834
      %867 = vst [vmem:[#allocation2 + $0xa8] sm:$0xff] %v835
      %868 = vst [vmem:[#allocation2 + $0xb0] sm:$0xff] %v836
      %869 = vst [vmem:[#allocation2 + $0xb8] sm:$0xff] %v837
      %870 = vst [vmem:[#allocation2 + $0xc0] sm:$0xff] %v838
      %871 = vst [vmem:[#allocation2 + $0xc8] sm:$0xff] %v839
      %872 = vst [vmem:[#allocation2 + $0xd0] sm:$0xff] %v840
      %873 = vst [vmem:[#allocation2 + $0xd8] sm:$0xff] %v841
      %874 = vst [vmem:[#allocation2 + $0xe0] sm:$0xff] %v842
      %875 = vst [vmem:[#allocation2 + $0xe8] sm:$0xff] %v843
      %876 = vst [vmem:[#allocation2 + $0xf0] sm:$0xff] %v844
      %877 = vst [vmem:[#allocation2 + $0xf8] sm:$0xff] %v845
      // Predicated region
      $region37: #{linear_block_fwd.1} parent=31 // pred_check
        %p878 = pneg %p345
      $region38: #{linear_block_fwd.1} parent=31 // pred_check_branch
        %880 = sbr.rel (%p878) target = $region40
      $region39: #{linear_block_fwd.1} parent=31 // pred_region
        %v881 = vld [vmem:[#allocation2] sm:$0xff]
        %v882 = vld [vmem:[#allocation2 + $0x8] sm:$0xff]
        %v883 = vld [vmem:[#allocation2 + $0x10] sm:$0xff]
        %v884 = vld [vmem:[#allocation2 + $0x18] sm:$0xff]
        %v885 = vld [vmem:[#allocation2 + $0x20] sm:$0xff]
        %v886 = vld [vmem:[#allocation2 + $0x28] sm:$0xff]
        %v887 = vld [vmem:[#allocation2 + $0x30] sm:$0xff]
        %v888 = vld [vmem:[#allocation2 + $0x38] sm:$0xff]
        %v889 = vld [vmem:[#allocation2 + $0x40] sm:$0xff]
        %v890 = vld [vmem:[#allocation2 + $0x48] sm:$0xff]
        %v891 = vld [vmem:[#allocation2 + $0x50] sm:$0xff]
        %v892 = vld [vmem:[#allocation2 + $0x58] sm:$0xff]
        %v893 = vld [vmem:[#allocation2 + $0x60] sm:$0xff]
        %v894 = vld [vmem:[#allocation2 + $0x68] sm:$0xff]
        %v895 = vld [vmem:[#allocation2 + $0x70] sm:$0xff]
        %v896 = vld [vmem:[#allocation2 + $0x78] sm:$0xff]
        %v897 = vld [vmem:[#allocation2 + $0x80] sm:$0xff]
        %v898 = vld [vmem:[#allocation2 + $0x88] sm:$0xff]
        %v899 = vld [vmem:[#allocation2 + $0x90] sm:$0xff]
        %v900 = vld [vmem:[#allocation2 + $0x98] sm:$0xff]
        %v901 = vld [vmem:[#allocation2 + $0xa0] sm:$0xff]
        %v902 = vld [vmem:[#allocation2 + $0xa8] sm:$0xff]
        %v903 = vld [vmem:[#allocation2 + $0xb0] sm:$0xff]
        %v904 = vld [vmem:[#allocation2 + $0xb8] sm:$0xff]
        %v905 = vld [vmem:[#allocation2 + $0xc0] sm:$0xff]
        %v906 = vld [vmem:[#allocation2 + $0xc8] sm:$0xff]
        %v907 = vld [vmem:[#allocation2 + $0xd0] sm:$0xff]
        %v908 = vld [vmem:[#allocation2 + $0xd8] sm:$0xff]
        %v909 = vld [vmem:[#allocation2 + $0xe0] sm:$0xff]
        %v910 = vld [vmem:[#allocation2 + $0xe8] sm:$0xff]
        %v911 = vld [vmem:[#allocation2 + $0xf0] sm:$0xff]
        %v912 = vld [vmem:[#allocation2 + $0xf8] sm:$0xff]
        %v913 = vld [vmem:[%s326] sm:$0x3]
        %v915 = vlaneseq
        %v916 = vshrl.u32 %v915, 7
        %v917 = vsub.s32 0, %v916
        %v918 = vrot.slane %v913, %v917
        %v919 = vlaneseq
        %v920 = vshrl.u32 %v919, 7
        %v921 = vsub.s32 1, %v920
        %v922 = vrot.slane %v913, %v921
        %v925 = vadd.f32 %v881, %v918
        %v926 = vadd.f32 %v882, %v922
        %v927 = vadd.f32 %v883, %v918
        %v928 = vadd.f32 %v884, %v922
        %v929 = vadd.f32 %v885, %v918
        %v930 = vadd.f32 %v886, %v922
        %v931 = vadd.f32 %v887, %v918
        %v932 = vadd.f32 %v888, %v922
        %v933 = vadd.f32 %v889, %v918
        %v934 = vadd.f32 %v890, %v922
        %v935 = vadd.f32 %v891, %v918
        %v936 = vadd.f32 %v892, %v922
        %v937 = vadd.f32 %v893, %v918
        %v938 = vadd.f32 %v894, %v922
        %v939 = vadd.f32 %v895, %v918
        %v940 = vadd.f32 %v896, %v922
        %v941 = vadd.f32 %v897, %v918
        %v942 = vadd.f32 %v898, %v922
        %v943 = vadd.f32 %v899, %v918
        %v944 = vadd.f32 %v900, %v922
        %v945 = vadd.f32 %v901, %v918
        %v946 = vadd.f32 %v902, %v922
        %v947 = vadd.f32 %v903, %v918
        %v948 = vadd.f32 %v904, %v922
        %v949 = vadd.f32 %v905, %v918
        %v950 = vadd.f32 %v906, %v922
        %v951 = vadd.f32 %v907, %v918
        %v952 = vadd.f32 %v908, %v922
        %v953 = vadd.f32 %v909, %v918
        %v954 = vadd.f32 %v910, %v922
        %v955 = vadd.f32 %v911, %v918
        %v956 = vadd.f32 %v912, %v922
        %v957 = vmax.f32 %v925, 0.0
        %v958 = vmax.f32 %v926, 0.0
        %v959 = vmax.f32 %v927, 0.0
        %v960 = vmax.f32 %v928, 0.0
        %v961 = vmax.f32 %v929, 0.0
        %v962 = vmax.f32 %v930, 0.0
        %v963 = vmax.f32 %v931, 0.0
        %v964 = vmax.f32 %v932, 0.0
        %v965 = vmax.f32 %v933, 0.0
        %v966 = vmax.f32 %v934, 0.0
        %v967 = vmax.f32 %v935, 0.0
        %v968 = vmax.f32 %v936, 0.0
        %v969 = vmax.f32 %v937, 0.0
        %v970 = vmax.f32 %v938, 0.0
        %v971 = vmax.f32 %v939, 0.0
        %v972 = vmax.f32 %v940, 0.0
        %v973 = vmax.f32 %v941, 0.0
        %v974 = vmax.f32 %v942, 0.0
        %v975 = vmax.f32 %v943, 0.0
        %v976 = vmax.f32 %v944, 0.0
        %v977 = vmax.f32 %v945, 0.0
        %v978 = vmax.f32 %v946, 0.0
        %v979 = vmax.f32 %v947, 0.0
        %v980 = vmax.f32 %v948, 0.0
        %v981 = vmax.f32 %v949, 0.0
        %v982 = vmax.f32 %v950, 0.0
        %v983 = vmax.f32 %v951, 0.0
        %v984 = vmax.f32 %v952, 0.0
        %v985 = vmax.f32 %v953, 0.0
        %v986 = vmax.f32 %v954, 0.0
        %v987 = vmax.f32 %v955, 0.0
        %v988 = vmax.f32 %v956, 0.0
        %s989 = scalar_select %p344, 1, 0
        %v990 = vstv %s989
        %vm991 = vcmp.eq.s32.totalorder %v990, 1
        %v992 = vsel %vm991, %v957, %v925
        %v993 = vsel %vm991, %v958, %v926
        %v994 = vsel %vm991, %v959, %v927
        %v995 = vsel %vm991, %v960, %v928
        %v996 = vsel %vm991, %v961, %v929
        %v997 = vsel %vm991, %v962, %v930
        %v998 = vsel %vm991, %v963, %v931
        %v999 = vsel %vm991, %v964, %v932
        %v1000 = vsel %vm991, %v965, %v933
        %v1001 = vsel %vm991, %v966, %v934
        %v1002 = vsel %vm991, %v967, %v935
        %v1003 = vsel %vm991, %v968, %v936
        %v1004 = vsel %vm991, %v969, %v937
        %v1005 = vsel %vm991, %v970, %v938
        %v1006 = vsel %vm991, %v971, %v939
        %v1007 = vsel %vm991, %v972, %v940
        %v1008 = vsel %vm991, %v973, %v941
        %v1009 = vsel %vm991, %v974, %v942
        %v1010 = vsel %vm991, %v975, %v943
        %v1011 = vsel %vm991, %v976, %v944
        %v1012 = vsel %vm991, %v977, %v945
        %v1013 = vsel %vm991, %v978, %v946
        %v1014 = vsel %vm991, %v979, %v947
        %v1015 = vsel %vm991, %v980, %v948
        %v1016 = vsel %vm991, %v981, %v949
        %v1017 = vsel %vm991, %v982, %v950
        %v1018 = vsel %vm991, %v983, %v951
        %v1019 = vsel %vm991, %v984, %v952
        %v1020 = vsel %vm991, %v985, %v953
        %v1021 = vsel %vm991, %v986, %v954
        %v1022 = vsel %vm991, %v987, %v955
        %v1023 = vsel %vm991, %v988, %v956
        %1024 = vst [vmem:[%s341] sm:$0xff] %v992
        %1025 = vst [vmem:[%s341 + $0x8] sm:$0xff] %v993
        %1026 = vst [vmem:[%s341 + $0x10] sm:$0xff] %v994
        %1027 = vst [vmem:[%s341 + $0x18] sm:$0xff] %v995
        %1028 = vst [vmem:[%s341 + $0x20] sm:$0xff] %v996
        %1029 = vst [vmem:[%s341 + $0x28] sm:$0xff] %v997
        %1030 = vst [vmem:[%s341 + $0x30] sm:$0xff] %v998
        %1031 = vst [vmem:[%s341 + $0x38] sm:$0xff] %v999
        %1032 = vst [vmem:[%s341 + $0x40] sm:$0xff] %v1000
        %1033 = vst [vmem:[%s341 + $0x48] sm:$0xff] %v1001
        %1034 = vst [vmem:[%s341 + $0x50] sm:$0xff] %v1002
        %1035 = vst [vmem:[%s341 + $0x58] sm:$0xff] %v1003
        %1036 = vst [vmem:[%s341 + $0x60] sm:$0xff] %v1004
        %1037 = vst [vmem:[%s341 + $0x68] sm:$0xff] %v1005
        %1038 = vst [vmem:[%s341 + $0x70] sm:$0xff] %v1006
        %1039 = vst [vmem:[%s341 + $0x78] sm:$0xff] %v1007
        %1040 = vst [vmem:[%s341 + $0x80] sm:$0xff] %v1008
        %1041 = vst [vmem:[%s341 + $0x88] sm:$0xff] %v1009
        %1042 = vst [vmem:[%s341 + $0x90] sm:$0xff] %v1010
        %1043 = vst [vmem:[%s341 + $0x98] sm:$0xff] %v1011
        %1044 = vst [vmem:[%s341 + $0xa0] sm:$0xff] %v1012
        %1045 = vst [vmem:[%s341 + $0xa8] sm:$0xff] %v1013
        %1046 = vst [vmem:[%s341 + $0xb0] sm:$0xff] %v1014
        %1047 = vst [vmem:[%s341 + $0xb8] sm:$0xff] %v1015
        %1048 = vst [vmem:[%s341 + $0xc0] sm:$0xff] %v1016
        %1049 = vst [vmem:[%s341 + $0xc8] sm:$0xff] %v1017
        %1050 = vst [vmem:[%s341 + $0xd0] sm:$0xff] %v1018
        %1051 = vst [vmem:[%s341 + $0xd8] sm:$0xff] %v1019
        %1052 = vst [vmem:[%s341 + $0xe0] sm:$0xff] %v1020
        %1053 = vst [vmem:[%s341 + $0xe8] sm:$0xff] %v1021
        %1054 = vst [vmem:[%s341 + $0xf0] sm:$0xff] %v1022
        %1055 = vst [vmem:[%s341 + $0xf8] sm:$0xff] %v1023
      $region40: #{linear_block_fwd.1} parent=31 // pred_fallthru
        _
      %s1056 = smul.u32 16, %s21
      %s1057 = smul.u32 2, %s22
      %p1058 = scmp.lt.s32.totalorder %s20, 1
      %s1059 = scalar_select %p1058, %s20, 1
      %p1060 = scmp.lt.s32.totalorder %s1056, 15
      %s1061 = scalar_select %p1060, %s1056, 15
      %p1062 = scmp.lt.s32.totalorder %s1057, 1
      %s1063 = scalar_select %p1062, %s1057, 1
      %s1064 = smul.addr %s1061, 2
      %s1065 = sadd.s32 %s1063, %s1064
      %s1066 = smul.addr %s1059, 32
      %s1067 = sadd.s32 %s1065, %s1066
      %s1068 = smul.addr %s1067, 8
      %s1069 = scalar_lea.vmem %s3, %s1068
      // Predicated region
      $region41: #{linear_block_fwd.1} parent=31 // pred_check
        %p1070 = pneg %p150
      $region42: #{linear_block_fwd.1} parent=31 // pred_check_branch
        %1072 = sbr.rel (%p1070) target = $region44
      $region43: #{linear_block_fwd.1} parent=31 // pred_region
        %s1073 = smul.u32 16, %s21
        %s1074 = smul.u32 2, %s22
      $region44: #{linear_block_fwd.1} parent=31 // pred_fallthru
        _
    $region32: #{linear_block_fwd.1} parent=5 // pred_fallthru
      _
    %p1075 = scmp.le.s32.totalorder 2, %s9
    // Predicated region
    $region45: #{linear_block_fwd.1} parent=5 // pred_check
      %p1076 = pneg %p1075
    $region46: #{linear_block_fwd.1} parent=5 // pred_check_branch
      %1078 = sbr.rel (%p1076) target = $region48
    $region47: #{linear_block_fwd.1} parent=5 // pred_region
      %s1079 = ssub.s32 %s9, 2
      // Predicated region
      $region49: #{linear_block_fwd.1} parent=47 // pred_check
        %p1080 = pneg %p156
      $region50: #{linear_block_fwd.1} parent=47 // pred_check_branch
        %1082 = sbr.rel (%p1080) target = $region52
      $region51: #{linear_block_fwd.1} parent=47 // pred_region
        %s1083 = smul.u32 16, %s25
        %s1084 = smul.u32 2, %s26
        %p1085 = scmp.lt.s32.totalorder %s24, 1
        %s1086 = scalar_select %p1085, %s24, 1
        %p1087 = scmp.lt.s32.totalorder %s1083, 15
        %s1088 = scalar_select %p1087, %s1083, 15
        %p1089 = scmp.lt.s32.totalorder %s1084, 1
        %s1090 = scalar_select %p1089, %s1084, 1
        %s1091 = smul.addr %s1088, 2
        %s1092 = sadd.s32 %s1090, %s1091
        %s1093 = smul.addr %s1086, 32
        %s1094 = sadd.s32 %s1092, %s1093
        %s1095 = smul.addr %s1094, 8
        %s1096 = scalar_lea.vmem %s3, %s1095
      $region52: #{linear_block_fwd.1} parent=47 // pred_fallthru
        _
    $region48: #{linear_block_fwd.1} parent=5 // pred_fallthru
      _
  $region6: #{linear_block_fwd.1} parent=0 // loop_footer
    %s13 = sadd.s32 1, %s9
  $region7: #{linear_block_fwd.1} parent=0 // loop_footer_branch
    %8 = sbr.rel target = $region3
  $region8: #{linear_block_fwd.1} parent=0 // loop_exit
    _

</llo_original>
